<compile_context>
chip_gen: v7x
topology: tpu7x:2x2x1
jax: 0.10.0
libtpu: 0.0.40
codegen_flags: <defaults>
</compile_context>

<pallas_src>
import jax
import jax.numpy as jnp
from jax.experimental import pallas as pl
from jax.experimental.pallas import tpu as pltpu

H1_PAD = 512   # 500 -> 512 (lane aligned)
H2_PAD = 128   # 100 -> 128 (lane aligned)


def mlp_kernel(x_ref, w1_ref, b1_ref, w2_ref, b2_ref, w3_ref, b3_ref, o_ref):
    # fc1 + ReLU  (MXU: bf16 operands, f32 accumulation)
    x = x_ref[...]                                                  # (TB, F) bf16
    h1 = jnp.dot(x, w1_ref[...], preferred_element_type=jnp.float32)
    h1 = jnp.maximum(h1 + b1_ref[...], 0.0).astype(jnp.bfloat16)    # (TB, 512)

    # fc2 + ReLU
    h2 = jnp.dot(h1, w2_ref[...], preferred_element_type=jnp.float32)
    h2 = jnp.maximum(h2 + b2_ref[...], 0.0)                         # (TB, 128) f32

    # fc3: output width 1 -> VPU multiply + XLU lane reduction (MXU stays free).
    o = jnp.sum(h2 * w3_ref[...], axis=-1, keepdims=True) + b3_ref[...]
    o_ref[...] = o.astype(o_ref.dtype)


def _round_up(n, m):
    return ((n + m - 1) // m) * m


def prepare_params(params):
    """Pad hidden dims to lane-aligned sizes; cast matmul operands to bf16."""
    w1, b1, w2, b2, w3, b3 = params
    f_in = w1.shape[0]
    w1p = jnp.zeros((f_in, H1_PAD), jnp.float32).at[:, : w1.shape[1]].set(w1)
    b1p = jnp.zeros((1, H1_PAD), jnp.float32).at[:, : b1.shape[1]].set(b1)
    w2p = jnp.zeros((H1_PAD, H2_PAD), jnp.float32).at[: w2.shape[0], : w2.shape[1]].set(w2)
    b2p = jnp.zeros((1, H2_PAD), jnp.float32).at[:, : b2.shape[1]].set(b2)
    # fc3 weight stored as a lane row (1, 128) for the VPU/XLU reduction.
    w3p = jnp.zeros((1, H2_PAD), jnp.float32).at[:, : w3.shape[0]].set(w3[:, 0][None, :])
    return (w1p.astype(jnp.bfloat16), b1p,
            w2p.astype(jnp.bfloat16), b2p,
            w3p, b3.reshape(1, 1))


def net_forward(x, params, *, tb=1024):
    """Fused 3-layer MLP forward. x: (B, F) f32. Returns (B, 1) f32."""
    w1, b1, w2, b2, w3, b3 = prepare_params(params)
    B, F = x.shape

    # Batch tile: a large lane/VMEM-friendly tile for big B (amortizes per-step
    # grid overhead); for small B shrink to the bf16-sublane-rounded batch so
    # there is no wasted work.
    tb = min(tb, _round_up(B, 16))
    b_pad = _round_up(B, tb)

    xp = x.astype(jnp.bfloat16)
    if b_pad != B:
        xp = jnp.pad(xp, ((0, b_pad - B), (0, 0)))

    const = lambda i: (0, 0)  # weights/biases: same block every step -> VMEM resident

    out = pl.pallas_call(
        mlp_kernel,
        out_shape=jax.ShapeDtypeStruct((b_pad, 1), jnp.float32),
        grid=(b_pad // tb,),
        in_specs=[
            pl.BlockSpec((tb, F), lambda i: (i, 0)),   # x: streamed over batch
            pl.BlockSpec((F, H1_PAD), const),          # w1 (bf16)
            pl.BlockSpec((1, H1_PAD), const),          # b1 (f32)
            pl.BlockSpec((H1_PAD, H2_PAD), const),     # w2 (bf16)
            pl.BlockSpec((1, H2_PAD), const),          # b2 (f32)
            pl.BlockSpec((1, H2_PAD), const),          # w3 row (f32)
            pl.BlockSpec((1, 1), const),               # b3 (f32)
        ],
        out_specs=pl.BlockSpec((tb, 1), lambda i: (i, 0)),
        compiler_params=pltpu.CompilerParams(
            dimension_semantics=("parallel",),         # batch grid axis is independent
        ),
    )(xp, w1, b1, w2, b2, w3, b3)
    return out[:B]


def init_params(key, in_features=14):
    # Deterministic init mimicking PyTorch's default Linear init:
    # U(-1/sqrt(fan_in), 1/sqrt(fan_in)) for both weight and bias.
    dims = [(in_features, 500), (500, 100), (100, 1)]
    params = []
    for (fan_in, fan_out) in dims:
        key, kw, kb = jax.random.split(key, 3)
        bound = 1.0 / jnp.sqrt(jnp.float32(fan_in))
        w = jax.random.uniform(kw, (fan_in, fan_out), jnp.float32, -bound, bound)
        b = jax.random.uniform(kb, (1, fan_out), jnp.float32, -bound, bound)
        params += [w, b]
    return params


def reference_forward(x, params):
    w1, b1, w2, b2, w3, b3 = params
    h1 = jnp.maximum(x @ w1 + b1, 0.0)
    h2 = jnp.maximum(h1 @ w2 + b2, 0.0)
    return h2 @ w3 + b3


if __name__ == "__main__":
    key = jax.random.PRNGKey(0)
    key, kx = jax.random.split(key)

    B, F_IN = 8, 14  # opt == 'L'
    x = jax.random.normal(kx, (B, F_IN), jnp.float32)
    params = init_params(key, in_features=F_IN)

    out = net_forward(x, params)
    jax.block_until_ready(out)

    ref = reference_forward(x, params)
    assert out.shape == (B, 1), out.shape
    # bf16 matmul operands (f32 accumulation) -> relaxed tolerance vs f32 ref.
    assert jnp.allclose(out, ref, atol=5e-2, rtol=5e-2), float(
        jnp.max(jnp.abs(out - ref)))

    print("KERNEL_OK")
</pallas_src>

<mosaic_0001>
module attributes {stable_mosaic.version = 11 : i64} {
  func.func @mlp_kernel(%arg0: i32, %arg1: memref<16x14xbf16, #tpu.memory_space<vmem>>, %arg2: memref<14x512xbf16, #tpu.memory_space<vmem>>, %arg3: memref<1x512xf32, #tpu.memory_space<vmem>>, %arg4: memref<512x128xbf16, #tpu.memory_space<vmem>>, %arg5: memref<1x128xf32, #tpu.memory_space<vmem>>, %arg6: memref<1x128xf32, #tpu.memory_space<vmem>>, %arg7: memref<1x1xf32, #tpu.memory_space<vmem>>, %arg8: memref<16x1xf32, #tpu.memory_space<vmem>>) attributes {dimension_semantics = [#tpu.dimension_semantics<parallel>], iteration_bounds = array<i64: 1>, scalar_prefetch = 0 : i64, scratch_operands = 0 : i64, tpu.core_type = #tpu.core_type<tc>, window_params = [{transform_indices = @transform_0, window_bounds = array<i64: 16, 14>}, {pipeline_mode = #tpu.pipeline_mode<synchronous>, transform_indices = @transform_1, window_bounds = array<i64: 14, 512>}, {pipeline_mode = #tpu.pipeline_mode<synchronous>, transform_indices = @transform_2, window_bounds = array<i64: 1, 512>}, {pipeline_mode = #tpu.pipeline_mode<synchronous>, transform_indices = @transform_3, window_bounds = array<i64: 512, 128>}, {pipeline_mode = #tpu.pipeline_mode<synchronous>, transform_indices = @transform_4, window_bounds = array<i64: 1, 128>}, {pipeline_mode = #tpu.pipeline_mode<synchronous>, transform_indices = @transform_5, window_bounds = array<i64: 1, 128>}, {pipeline_mode = #tpu.pipeline_mode<synchronous>, transform_indices = @transform_6, window_bounds = array<i64: 1, 1>}, {transform_indices = @transform_7, window_bounds = array<i64: 16, 1>}]} {
    %c0 = arith.constant 0 : index
    %c0_0 = arith.constant 0 : index
    %0 = vector.load %arg1[%c0, %c0_0] : memref<16x14xbf16, #tpu.memory_space<vmem>>, vector<16x14xbf16>
    %c0_1 = arith.constant 0 : index
    %c0_2 = arith.constant 0 : index
    %1 = vector.load %arg2[%c0_1, %c0_2] : memref<14x512xbf16, #tpu.memory_space<vmem>>, vector<14x512xbf16>
    %cst = arith.constant dense<0.000000e+00> : vector<16x512xf32>
    %2 = tpu.matmul %0, %1, %cst {dimension_numbers = #tpu.dot_dimension_numbers<[1], [0], [0], [1], [0, 0, 1, 1], [], []>} : vector<16x14xbf16>, vector<14x512xbf16>, vector<16x512xf32> -> vector<16x512xf32>
    %c0_3 = arith.constant 0 : index
    %c0_4 = arith.constant 0 : index
    %3 = vector.load %arg3[%c0_3, %c0_4] : memref<1x512xf32, #tpu.memory_space<vmem>>, vector<1x512xf32>
    %4 = vector.broadcast %3 : vector<1x512xf32> to vector<16x512xf32>
    %5 = arith.addf %2, %4 : vector<16x512xf32>
    %cst_5 = arith.constant 0.000000e+00 : f32
    %6 = vector.broadcast %cst_5 : f32 to vector<16x512xf32>
    %7 = arith.maximumf %5, %6 : vector<16x512xf32>
    %8 = arith.truncf %7 : vector<16x512xf32> to vector<16x512xbf16>
    %c0_6 = arith.constant 0 : index
    %c0_7 = arith.constant 0 : index
    %9 = vector.load %arg4[%c0_6, %c0_7] : memref<512x128xbf16, #tpu.memory_space<vmem>>, vector<512x128xbf16>
    %cst_8 = arith.constant dense<0.000000e+00> : vector<16x128xf32>
    %10 = tpu.matmul %8, %9, %cst_8 {dimension_numbers = #tpu.dot_dimension_numbers<[1], [0], [0], [1], [0, 0, 1, 1], [], []>} : vector<16x512xbf16>, vector<512x128xbf16>, vector<16x128xf32> -> vector<16x128xf32>
    %c0_9 = arith.constant 0 : index
    %c0_10 = arith.constant 0 : index
    %11 = vector.load %arg5[%c0_9, %c0_10] : memref<1x128xf32, #tpu.memory_space<vmem>>, vector<1x128xf32>
    %12 = vector.broadcast %11 : vector<1x128xf32> to vector<16x128xf32>
    %13 = arith.addf %10, %12 : vector<16x128xf32>
    %cst_11 = arith.constant 0.000000e+00 : f32
    %14 = vector.broadcast %cst_11 : f32 to vector<16x128xf32>
    %15 = arith.maximumf %13, %14 : vector<16x128xf32>
    %c0_12 = arith.constant 0 : index
    %c0_13 = arith.constant 0 : index
    %16 = vector.load %arg6[%c0_12, %c0_13] : memref<1x128xf32, #tpu.memory_space<vmem>>, vector<1x128xf32>
    %17 = vector.broadcast %16 : vector<1x128xf32> to vector<16x128xf32>
    %18 = arith.mulf %15, %17 : vector<16x128xf32>
    %cst_14 = arith.constant dense<0.000000e+00> : vector<16xf32>
    %19 = vector.multi_reduction <add>, %18, %cst_14 [1] : vector<16x128xf32> to vector<16xf32>
    %20 = vector.shape_cast %19 : vector<16xf32> to vector<16x1xf32>
    %c0_15 = arith.constant 0 : index
    %c0_16 = arith.constant 0 : index
    %21 = vector.load %arg7[%c0_15, %c0_16] : memref<1x1xf32, #tpu.memory_space<vmem>>, vector<1x1xf32>
    %22 = vector.broadcast %21 : vector<1x1xf32> to vector<16x1xf32>
    %23 = arith.addf %20, %22 : vector<16x1xf32>
    %c0_17 = arith.constant 0 : index
    %c0_18 = arith.constant 0 : index
    %24 = vector.load %arg8[%c0_17, %c0_18] : memref<16x1xf32, #tpu.memory_space<vmem>>, vector<16x1xf32>
    tpu.vector_store %arg8[%c0_17, %c0_18], %23 {strides = array<i32>} : memref<16x1xf32, #tpu.memory_space<vmem>>, vector<16x1xf32>,
    return
  }
  func.func @transform_0(%arg0: i32) -> (i32, i32) {
    %c0_i32 = arith.constant 0 : i32
    %c0_i32_0 = arith.constant 0 : i32
    return %arg0, %c0_i32 : i32, i32
  }
  func.func @transform_1(%arg0: i32) -> (i32, i32) {
    %c0_i32 = arith.constant 0 : i32
    %c0_i32_0 = arith.constant 0 : i32
    %c0_i32_1 = arith.constant 0 : i32
    return %c0_i32, %c0_i32_0 : i32, i32
  }
  func.func @transform_2(%arg0: i32) -> (i32, i32) {
    %c0_i32 = arith.constant 0 : i32
    %c0_i32_0 = arith.constant 0 : i32
    %c0_i32_1 = arith.constant 0 : i32
    return %c0_i32, %c0_i32_0 : i32, i32
  }
  func.func @transform_3(%arg0: i32) -> (i32, i32) {
    %c0_i32 = arith.constant 0 : i32
    %c0_i32_0 = arith.constant 0 : i32
    %c0_i32_1 = arith.constant 0 : i32
    return %c0_i32, %c0_i32_0 : i32, i32
  }
  func.func @transform_4(%arg0: i32) -> (i32, i32) {
    %c0_i32 = arith.constant 0 : i32
    %c0_i32_0 = arith.constant 0 : i32
    %c0_i32_1 = arith.constant 0 : i32
    return %c0_i32, %c0_i32_0 : i32, i32
  }
  func.func @transform_5(%arg0: i32) -> (i32, i32) {
    %c0_i32 = arith.constant 0 : i32
    %c0_i32_0 = arith.constant 0 : i32
    %c0_i32_1 = arith.constant 0 : i32
    return %c0_i32, %c0_i32_0 : i32, i32
  }
  func.func @transform_6(%arg0: i32) -> (i32, i32) {
    %c0_i32 = arith.constant 0 : i32
    %c0_i32_0 = arith.constant 0 : i32
    %c0_i32_1 = arith.constant 0 : i32
    return %c0_i32, %c0_i32_0 : i32, i32
  }
  func.func @transform_7(%arg0: i32) -> (i32, i32) {
    %c0_i32 = arith.constant 0 : i32
    %c0_i32_0 = arith.constant 0 : i32
    return %arg0, %c0_i32 : i32, i32
  }
}

</mosaic_0001>

<llo_original>
// kernel: tpu_custom_call.1
$region0: #{tpu_custom_call.1}
  #allocation0 [shape = 'u32[]', space=smem, size = 0x4, offset = 0x4, fixed_abs, tag = 'smem constant byte address 0x4 - core index']
  #allocation1 [shape = 'u32[144,128]{1,0:T(1,128)}', space=vmem, size = 0x12000, scoped, tag = 'internal scratch']
  #allocation2 [shape = 'f32[1,1]{1,0:T(1,128)S(1)}', space=vmem, size = 0x200, scoped, tag = 'scoped memory for tpu_custom_call.1']
  %s0 = inlined_call_operand.hbm [shape: bf16[16,14], index: 0, kind: input, shape index: {}]
  %s1 = inlined_call_operand.hbm [shape: bf16[14,512], index: 1, kind: input, shape index: {}]
  %s2 = inlined_call_operand.vmem [shape: f32[1,512], index: 2, kind: input, shape index: {}]
  %s3 = inlined_call_operand.hbm [shape: bf16[512,128], index: 3, kind: input, shape index: {}]
  %s4 = inlined_call_operand.vmem [shape: f32[1,128], index: 4, kind: input, shape index: {}]
  %s5 = inlined_call_operand.vmem [shape: f32[1,128], index: 5, kind: input, shape index: {}]
  %s6 = inlined_call_operand.<no memory space> [shape: f32[1,1], index: 6, kind: input, shape index: {}]
  %s7 = inlined_call_operand.vmem [shape: f32[16,1], index: 7, kind: output, shape index: {}]
  %s8 = sld [smem:[#allocation0]]
  $region50: #{tpu_custom_call.1} parent=0
    _
  %s10 = ssub.s32 1, %s8
  %s11 = scalar_select 0, %s10, %s8
  %v12 = vstv %s6
  %13 = vst [vmem:[#allocation2] sm:$0x1] %v12
  $region1: #{tpu_custom_call.1} parent=0
    #allocation3 [shape = 'u8[4096]{0}', space=vmem, size = 0x1000, scoped, tag = 'input window, operand 0, single buffered']
    #allocation4 [shape = 's32[1]{0}', space=sflag, size = 0x4, scoped, tag = 'scoped memory for tpu_custom_call.1']
    #allocation5 [shape = 'u8[16384]{0}', space=vmem, size = 0x4000, scoped, tag = 'input window, operand 1, single buffered']
    #allocation6 [shape = 's32[1]{0}', space=sflag, size = 0x4, scoped, tag = 'scoped memory for tpu_custom_call.1']
    #allocation7 [shape = 'u8[131072]{0}', space=vmem, size = 0x20000, scoped, tag = 'input window, operand 3, single buffered']
    %14 = vsyncpa [#allocation4], 0
    %15 = vsyncpa [#allocation6], 0
    // Predicated region
    $region2: #{tpu_custom_call.1} parent=1 // pred_check
      _
    $region3: #{tpu_custom_call.1} parent=1 // pred_check_branch
      %17 = sbr.rel (0) target = $region5
    $region4: #{tpu_custom_call.1} parent=1 // pred_region
      %s19 = ssub.s32 128, 128
      %20 = vsyncadd [#allocation4], %s19
      %s21 = sshll.u32 [#allocation3], 4
      %s22 = int_to_ptr.vmem [resolvable:$true] %s21
      %27 = dma.hbm_to_vmem [thread:$0]  %s0, 128, %s22, [#allocation4], 64, 64, 4
    $region5: #{tpu_custom_call.1} parent=1 // pred_fallthru
      _
    // Predicated region
    $region6: #{tpu_custom_call.1} parent=1 // pred_check
      _
    $region7: #{tpu_custom_call.1} parent=1 // pred_check_branch
      %29 = sbr.rel (0) target = $region9
    $region8: #{tpu_custom_call.1} parent=1 // pred_region
      %s31 = ssub.s32 512, 512
      %32 = vsyncadd [#allocation6], %s31
      %s33 = sshll.u32 [#allocation5], 4
      %s34 = int_to_ptr.vmem [resolvable:$true] %s33
      %39 = dma.hbm_to_vmem [thread:$0]  %s1, 512, %s34, [#allocation6], 256, 256, 16
    $region9: #{tpu_custom_call.1} parent=1 // pred_fallthru
      _
    // Predicated region
    $region10: #{tpu_custom_call.1} parent=1 // pred_check
      _
    $region11: #{tpu_custom_call.1} parent=1 // pred_check_branch
      %41 = sbr.rel (0) target = $region13
    $region12: #{tpu_custom_call.1} parent=1 // pred_region
      _
    $region13: #{tpu_custom_call.1} parent=1 // pred_fallthru
      _
    // Predicated region
    $region14: #{tpu_custom_call.1} parent=1 // pred_check
      _
    $region15: #{tpu_custom_call.1} parent=1 // pred_check_branch
      %43 = sbr.rel (0) target = $region17
    $region16: #{tpu_custom_call.1} parent=1 // pred_region
      %s45 = ssub.s32 4096, 4096
      %46 = vsyncadd [#allocation6], %s45
      %s47 = sshll.u32 [#allocation7], 4
      %s48 = int_to_ptr.vmem [resolvable:$true] %s47
      %53 = dma.hbm_to_vmem [thread:$0]  %s3, 4096, %s48, [#allocation6], 64, 64, 4
    $region17: #{tpu_custom_call.1} parent=1 // pred_fallthru
      _
    // Predicated region
    $region18: #{tpu_custom_call.1} parent=1 // pred_check
      _
    $region19: #{tpu_custom_call.1} parent=1 // pred_check_branch
      %55 = sbr.rel (0) target = $region21
    $region20: #{tpu_custom_call.1} parent=1 // pred_region
      _
    $region21: #{tpu_custom_call.1} parent=1 // pred_fallthru
      _
    // Predicated region
    $region22: #{tpu_custom_call.1} parent=1 // pred_check
      _
    $region23: #{tpu_custom_call.1} parent=1 // pred_check_branch
      %57 = sbr.rel (0) target = $region25
    $region24: #{tpu_custom_call.1} parent=1 // pred_region
      _
    $region25: #{tpu_custom_call.1} parent=1 // pred_fallthru
      _
    // Predicated region
    $region26: #{tpu_custom_call.1} parent=1 // pred_check
      _
    $region27: #{tpu_custom_call.1} parent=1 // pred_check_branch
      %59 = sbr.rel (0) target = $region29
    $region28: #{tpu_custom_call.1} parent=1 // pred_region
      _
    $region29: #{tpu_custom_call.1} parent=1 // pred_fallthru
      _
    // Predicated region
    $region30: #{tpu_custom_call.1} parent=1 // pred_check
      _
    $region31: #{tpu_custom_call.1} parent=1 // pred_check_branch
      %61 = sbr.rel (0) target = $region33
    $region32: #{tpu_custom_call.1} parent=1 // pred_region
      %62 = dma.done [#allocation4], 128
    $region33: #{tpu_custom_call.1} parent=1 // pred_fallthru
      _
    // Predicated region
    $region34: #{tpu_custom_call.1} parent=1 // pred_check
      _
    $region35: #{tpu_custom_call.1} parent=1 // pred_check_branch
      %64 = sbr.rel (0) target = $region37
    $region36: #{tpu_custom_call.1} parent=1 // pred_region
      %65 = dma.done [#allocation6], 512
    $region37: #{tpu_custom_call.1} parent=1 // pred_fallthru
      _
    // Predicated region
    $region38: #{tpu_custom_call.1} parent=1 // pred_check
      _
    $region39: #{tpu_custom_call.1} parent=1 // pred_check_branch
      %67 = sbr.rel (0) target = $region41
    $region40: #{tpu_custom_call.1} parent=1 // pred_region
      %68 = dma.done [#allocation6], 4096
    $region41: #{tpu_custom_call.1} parent=1 // pred_fallthru
      _
    %v70 = vld [vmem:[#allocation3] sm:$0xf]
    %v71 = vld [vmem:[#allocation3 + $0x4] sm:$0xf]
    %v72 = vld [vmem:[#allocation5] sm:$0xff]
    %v73 = vld [vmem:[#allocation5 + $0x8] sm:$0xff]
    %v74 = vld [vmem:[#allocation5 + $0x10] sm:$0x77]
    %v75 = vld [vmem:[#allocation5 + $0x18] sm:$0x77]
    %v76 = vld [vmem:[%s2] sm:$0xf]
    %v78 = vlaneseq
    %v79 = vshrl.u32 %v78, 7
    %v80 = vsub.s32 0, %v79
    %v81 = vrot.slane %v76, %v80
    %v82 = vlaneseq
    %v83 = vshrl.u32 %v82, 7
    %v84 = vsub.s32 1, %v83
    %v85 = vrot.slane %v76, %v84
    %v86 = vlaneseq
    %v87 = vshrl.u32 %v86, 7
    %v88 = vsub.s32 2, %v87
    %v89 = vrot.slane %v76, %v88
    %v90 = vlaneseq
    %v91 = vshrl.u32 %v90, 7
    %v92 = vsub.s32 3, %v91
    %v93 = vrot.slane %v76, %v92
    %v100 = vunpack.c.l.b16 %v70
    %v101 = vunpack.c.l.b16 %v71
    %v102 = vpack.c.b16 %v101, %v100
    %v107 = vunpack.c.l.b16 %v72
    %v108 = vunpack.c.h.b16 %v72
    %v109 = vunpack.c.l.b16 %v73
    %v110 = vunpack.c.h.b16 %v73
    %v111 = vunpack.c.l.b16 %v74
    %v112 = vunpack.c.h.b16 %v74
    %v113 = vunpack.c.l.b16 %v75
    %v114 = vunpack.c.h.b16 %v75
    %v115 = vpack.c.b16 %v111, %v107
    %v116 = vpack.c.b16 %v112, %v108
    %v117 = vpack.c.b16 %v113, %v109
    %v118 = vpack.c.b16 %v114, %v110
    %vm119 = vcmask 113664
    %v121 = vsel %vm119, %v102, 0
    %vm123 = vcmask 1046528
    %v125 = vsel %vm123, %v115, 0
    %v128 = vsel %vm123, %v116, 0
    %v131 = vsel %vm123, %v117, 0
    %v134 = vsel %vm123, %v118, 0
    %136 = vmatprep.subr.bf16.mxu0 %v128
    %137 = vmatpush1.bf16.msra.mxu0 %v125
    %138 = vmatprep.subr.bf16.mxu0 0
    %139 = vmatpush1.bf16.msra.mxu0 0
    %140 = vmatprep.subr.bf16.mxu0 0
    %141 = vmatpush1.bf16.msra.mxu0 0
    %142 = vmatprep.subr.bf16.mxu0 0
    %143 = vmatpush1.bf16.msra.mxu0 0
    %144 = vmatprep.subr.bf16.mxu0 0
    %145 = vmatpush1.bf16.msra.mxu0 0
    %146 = vmatprep.subr.bf16.mxu0 0
    %147 = vmatpush1.bf16.msra.mxu0 0
    %148 = vmatprep.subr.bf16.mxu0 0
    %149 = vmatpush1.bf16.msra.mxu0 0
    %150 = vmatprep.subr.bf16.mxu0 0
    %151 = vmatpush1.bf16.msra.mxu0 0
    %152 = vmatprep.subr.bf16.mxu0 0
    %153 = vmatpush1.bf16.msra.mxu0 0
    %154 = vmatprep.subr.bf16.mxu0 0
    %155 = vmatpush1.bf16.msra.mxu0 0
    %156 = vmatprep.subr.bf16.mxu0 0
    %157 = vmatpush1.bf16.msra.mxu0 0
    %158 = vmatprep.subr.bf16.mxu0 0
    %159 = vmatpush1.bf16.msra.mxu0 0
    %160 = vmatprep.subr.bf16.mxu0 0
    %161 = vmatpush1.bf16.msra.mxu0 0
    %162 = vmatprep.subr.bf16.mxu0 0
    %163 = vmatpush1.bf16.msra.mxu0 0
    %164 = vmatprep.subr.bf16.mxu0 0
    %165 = vmatpush1.bf16.msra.mxu0 0
    %166 = vmatprep.subr.bf16.mxu0 0
    %167 = vmatpush1.bf16.msra.mxu0 0
    %168 = vmatprep.mubr.bf16.mxu0 0
    %169 = vmatmul.mubr.bf16.gmra.mrb[0].mxu0 %v121
    %v170 = vpop.f32.mrb[0].mxu0
    %v171 = vadd.f32 %v81, %v170
    %v172 = vpop.f32.mrb[0].mxu0
    %v173 = vadd.f32 %v85, %v172
    %v174 = vpop.f32.mrb[0].mxu0
    %v175 = vadd.f32 %v81, %v174
    %v176 = vpop.f32.mrb[0].mxu0
    %v177 = vadd.f32 %v85, %v176
    %178 = vdwg.mxu0
    %179 = vmatprep.subr.bf16.mxu0 %v134
    %180 = vmatpush1.bf16.msra.mxu0 %v131
    %181 = vmatprep.subr.bf16.mxu0 0
    %182 = vmatpush1.bf16.msra.mxu0 0
    %183 = vmatprep.subr.bf16.mxu0 0
    %184 = vmatpush1.bf16.msra.mxu0 0
    %185 = vmatprep.subr.bf16.mxu0 0
    %186 = vmatpush1.bf16.msra.mxu0 0
    %187 = vmatprep.subr.bf16.mxu0 0
    %188 = vmatpush1.bf16.msra.mxu0 0
    %189 = vmatprep.subr.bf16.mxu0 0
    %190 = vmatpush1.bf16.msra.mxu0 0
    %191 = vmatprep.subr.bf16.mxu0 0
    %192 = vmatpush1.bf16.msra.mxu0 0
    %193 = vmatprep.subr.bf16.mxu0 0
    %194 = vmatpush1.bf16.msra.mxu0 0
    %195 = vmatprep.subr.bf16.mxu0 0
    %196 = vmatpush1.bf16.msra.mxu0 0
    %197 = vmatprep.subr.bf16.mxu0 0
    %198 = vmatpush1.bf16.msra.mxu0 0
    %199 = vmatprep.subr.bf16.mxu0 0
    %200 = vmatpush1.bf16.msra.mxu0 0
    %201 = vmatprep.subr.bf16.mxu0 0
    %202 = vmatpush1.bf16.msra.mxu0 0
    %203 = vmatprep.subr.bf16.mxu0 0
    %204 = vmatpush1.bf16.msra.mxu0 0
    %205 = vmatprep.subr.bf16.mxu0 0
    %206 = vmatpush1.bf16.msra.mxu0 0
    %207 = vmatprep.subr.bf16.mxu0 0
    %208 = vmatpush1.bf16.msra.mxu0 0
    %209 = vmatprep.subr.bf16.mxu0 0
    %210 = vmatpush1.bf16.msra.mxu0 0
    %211 = vmatprep.mubr.bf16.mxu0 0
    %212 = vmatmul.mubr.bf16.gmra.mrb[0].mxu0 %v121
    %v213 = vpop.f32.mrb[0].mxu0
    %v214 = vadd.f32 %v89, %v213
    %v215 = vpop.f32.mrb[0].mxu0
    %v216 = vadd.f32 %v93, %v215
    %v217 = vpop.f32.mrb[0].mxu0
    %v218 = vadd.f32 %v89, %v217
    %v219 = vpop.f32.mrb[0].mxu0
    %v220 = vadd.f32 %v93, %v219
    %221 = vdwg.mxu0
    %v222 = vmax.f32 %v171, 0.0
    %v223 = vmax.f32 %v173, 0.0
    %v224 = vmax.f32 %v214, 0.0
    %v225 = vmax.f32 %v216, 0.0
    %v226 = vmax.f32 %v175, 0.0
    %v227 = vmax.f32 %v177, 0.0
    %v228 = vmax.f32 %v218, 0.0
    %v229 = vmax.f32 %v220, 0.0
    %v230 = vpack.c.bf16 %v226, %v222
    %v231 = vpack.c.bf16 %v227, %v223
    %v232 = vpack.c.bf16 %v228, %v224
    %v233 = vpack.c.bf16 %v229, %v225
    %v234 = vld [vmem:[#allocation7] sm:$0xf]
    %v235 = vld [vmem:[#allocation7 + $0x4] sm:$0xf]
    %v236 = vld [vmem:[#allocation7 + $0x8] sm:$0xf]
    %v237 = vld [vmem:[#allocation7 + $0xc] sm:$0xf]
    %v238 = vld [vmem:[#allocation7 + $0x10] sm:$0xf]
    %v239 = vld [vmem:[#allocation7 + $0x14] sm:$0xf]
    %v240 = vld [vmem:[#allocation7 + $0x18] sm:$0xf]
    %v241 = vld [vmem:[#allocation7 + $0x1c] sm:$0xf]
    %v242 = vld [vmem:[#allocation7 + $0x20] sm:$0xf]
    %v243 = vld [vmem:[#allocation7 + $0x24] sm:$0xf]
    %v244 = vld [vmem:[#allocation7 + $0x28] sm:$0xf]
    %v245 = vld [vmem:[#allocation7 + $0x2c] sm:$0xf]
    %v246 = vld [vmem:[#allocation7 + $0x30] sm:$0xf]
    %v247 = vld [vmem:[#allocation7 + $0x34] sm:$0xf]
    %v248 = vld [vmem:[#allocation7 + $0x38] sm:$0xf]
    %v249 = vld [vmem:[#allocation7 + $0x3c] sm:$0xf]
    %v250 = vld [vmem:[#allocation7 + $0x40] sm:$0xf]
    %v251 = vld [vmem:[#allocation7 + $0x44] sm:$0xf]
    %v252 = vld [vmem:[#allocation7 + $0x48] sm:$0xf]
    %v253 = vld [vmem:[#allocation7 + $0x4c] sm:$0xf]
    %v254 = vld [vmem:[#allocation7 + $0x50] sm:$0xf]
    %v255 = vld [vmem:[#allocation7 + $0x54] sm:$0xf]
    %v256 = vld [vmem:[#allocation7 + $0x58] sm:$0xf]
    %v257 = vld [vmem:[#allocation7 + $0x5c] sm:$0xf]
    %v258 = vld [vmem:[#allocation7 + $0x60] sm:$0xf]
    %v259 = vld [vmem:[#allocation7 + $0x64] sm:$0xf]
    %v260 = vld [vmem:[#allocation7 + $0x68] sm:$0xf]
    %v261 = vld [vmem:[#allocation7 + $0x6c] sm:$0xf]
    %v262 = vld [vmem:[#allocation7 + $0x70] sm:$0xf]
    %v263 = vld [vmem:[#allocation7 + $0x74] sm:$0xf]
    %v264 = vld [vmem:[#allocation7 + $0x78] sm:$0xf]
    %v265 = vld [vmem:[#allocation7 + $0x7c] sm:$0xf]
    %v266 = vld [vmem:[#allocation7 + $0x80] sm:$0xf]
    %v267 = vld [vmem:[#allocation7 + $0x84] sm:$0xf]
    %v268 = vld [vmem:[#allocation7 + $0x88] sm:$0xf]
    %v269 = vld [vmem:[#allocation7 + $0x8c] sm:$0xf]
    %v270 = vld [vmem:[#allocation7 + $0x90] sm:$0xf]
    %v271 = vld [vmem:[#allocation7 + $0x94] sm:$0xf]
    %v272 = vld [vmem:[#allocation7 + $0x98] sm:$0xf]
    %v273 = vld [vmem:[#allocation7 + $0x9c] sm:$0xf]
    %v274 = vld [vmem:[#allocation7 + $0xa0] sm:$0xf]
    %v275 = vld [vmem:[#allocation7 + $0xa4] sm:$0xf]
    %v276 = vld [vmem:[#allocation7 + $0xa8] sm:$0xf]
    %v277 = vld [vmem:[#allocation7 + $0xac] sm:$0xf]
    %v278 = vld [vmem:[#allocation7 + $0xb0] sm:$0xf]
    %v279 = vld [vmem:[#allocation7 + $0xb4] sm:$0xf]
    %v280 = vld [vmem:[#allocation7 + $0xb8] sm:$0xf]
    %v281 = vld [vmem:[#allocation7 + $0xbc] sm:$0xf]
    %v282 = vld [vmem:[#allocation7 + $0xc0] sm:$0xf]
    %v283 = vld [vmem:[#allocation7 + $0xc4] sm:$0xf]
    %v284 = vld [vmem:[#allocation7 + $0xc8] sm:$0xf]
    %v285 = vld [vmem:[#allocation7 + $0xcc] sm:$0xf]
    %v286 = vld [vmem:[#allocation7 + $0xd0] sm:$0xf]
    %v287 = vld [vmem:[#allocation7 + $0xd4] sm:$0xf]
    %v288 = vld [vmem:[#allocation7 + $0xd8] sm:$0xf]
    %v289 = vld [vmem:[#allocation7 + $0xdc] sm:$0xf]
    %v290 = vld [vmem:[#allocation7 + $0xe0] sm:$0xf]
    %v291 = vld [vmem:[#allocation7 + $0xe4] sm:$0xf]
    %v292 = vld [vmem:[#allocation7 + $0xe8] sm:$0xf]
    %v293 = vld [vmem:[#allocation7 + $0xec] sm:$0xf]
    %v294 = vld [vmem:[#allocation7 + $0xf0] sm:$0xf]
    %v295 = vld [vmem:[#allocation7 + $0xf4] sm:$0xf]
    %v296 = vld [vmem:[#allocation7 + $0xf8] sm:$0xf]
    %v297 = vld [vmem:[#allocation7 + $0xfc] sm:$0xf]
    %v298 = vld [vmem:[%s4] sm:$0x1]
    %v300 = vlaneseq
    %v301 = vshrl.u32 %v300, 7
    %v302 = vsub.s32 0, %v301
    %v303 = vrot.slane %v298, %v302
    %v369 = vunpack.c.l.b16 %v234
    %v370 = vunpack.c.l.b16 %v235
    %v371 = vunpack.c.l.b16 %v236
    %v372 = vunpack.c.l.b16 %v237
    %v373 = vunpack.c.l.b16 %v238
    %v374 = vunpack.c.l.b16 %v239
    %v375 = vunpack.c.l.b16 %v240
    %v376 = vunpack.c.l.b16 %v241
    %v377 = vunpack.c.l.b16 %v242
    %v378 = vunpack.c.l.b16 %v243
    %v379 = vunpack.c.l.b16 %v244
    %v380 = vunpack.c.l.b16 %v245
    %v381 = vunpack.c.l.b16 %v246
    %v382 = vunpack.c.l.b16 %v247
    %v383 = vunpack.c.l.b16 %v248
    %v384 = vunpack.c.l.b16 %v249
    %v385 = vunpack.c.l.b16 %v250
    %v386 = vunpack.c.l.b16 %v251
    %v387 = vunpack.c.l.b16 %v252
    %v388 = vunpack.c.l.b16 %v253
    %v389 = vunpack.c.l.b16 %v254
    %v390 = vunpack.c.l.b16 %v255
    %v391 = vunpack.c.l.b16 %v256
    %v392 = vunpack.c.l.b16 %v257
    %v393 = vunpack.c.l.b16 %v258
    %v394 = vunpack.c.l.b16 %v259
    %v395 = vunpack.c.l.b16 %v260
    %v396 = vunpack.c.l.b16 %v261
    %v397 = vunpack.c.l.b16 %v262
    %v398 = vunpack.c.l.b16 %v263
    %v399 = vunpack.c.l.b16 %v264
    %v400 = vunpack.c.l.b16 %v265
    %v401 = vunpack.c.l.b16 %v266
    %v402 = vunpack.c.l.b16 %v267
    %v403 = vunpack.c.l.b16 %v268
    %v404 = vunpack.c.l.b16 %v269
    %v405 = vunpack.c.l.b16 %v270
    %v406 = vunpack.c.l.b16 %v271
    %v407 = vunpack.c.l.b16 %v272
    %v408 = vunpack.c.l.b16 %v273
    %v409 = vunpack.c.l.b16 %v274
    %v410 = vunpack.c.l.b16 %v275
    %v411 = vunpack.c.l.b16 %v276
    %v412 = vunpack.c.l.b16 %v277
    %v413 = vunpack.c.l.b16 %v278
    %v414 = vunpack.c.l.b16 %v279
    %v415 = vunpack.c.l.b16 %v280
    %v416 = vunpack.c.l.b16 %v281
    %v417 = vunpack.c.l.b16 %v282
    %v418 = vunpack.c.l.b16 %v283
    %v419 = vunpack.c.l.b16 %v284
    %v420 = vunpack.c.l.b16 %v285
    %v421 = vunpack.c.l.b16 %v286
    %v422 = vunpack.c.l.b16 %v287
    %v423 = vunpack.c.l.b16 %v288
    %v424 = vunpack.c.l.b16 %v289
    %v425 = vunpack.c.l.b16 %v290
    %v426 = vunpack.c.l.b16 %v291
    %v427 = vunpack.c.l.b16 %v292
    %v428 = vunpack.c.l.b16 %v293
    %v429 = vunpack.c.l.b16 %v294
    %v430 = vunpack.c.l.b16 %v295
    %v431 = vunpack.c.l.b16 %v296
    %v432 = vunpack.c.l.b16 %v297
    %v433 = vpack.c.b16 %v370, %v369
    %v434 = vpack.c.b16 %v372, %v371
    %v435 = vpack.c.b16 %v374, %v373
    %v436 = vpack.c.b16 %v376, %v375
    %v437 = vpack.c.b16 %v378, %v377
    %v438 = vpack.c.b16 %v380, %v379
    %v439 = vpack.c.b16 %v382, %v381
    %v440 = vpack.c.b16 %v384, %v383
    %v441 = vpack.c.b16 %v386, %v385
    %v442 = vpack.c.b16 %v388, %v387
    %v443 = vpack.c.b16 %v390, %v389
    %v444 = vpack.c.b16 %v392, %v391
    %v445 = vpack.c.b16 %v394, %v393
    %v446 = vpack.c.b16 %v396, %v395
    %v447 = vpack.c.b16 %v398, %v397
    %v448 = vpack.c.b16 %v400, %v399
    %v449 = vpack.c.b16 %v402, %v401
    %v450 = vpack.c.b16 %v404, %v403
    %v451 = vpack.c.b16 %v406, %v405
    %v452 = vpack.c.b16 %v408, %v407
    %v453 = vpack.c.b16 %v410, %v409
    %v454 = vpack.c.b16 %v412, %v411
    %v455 = vpack.c.b16 %v414, %v413
    %v456 = vpack.c.b16 %v416, %v415
    %v457 = vpack.c.b16 %v418, %v417
    %v458 = vpack.c.b16 %v420, %v419
    %v459 = vpack.c.b16 %v422, %v421
    %v460 = vpack.c.b16 %v424, %v423
    %v461 = vpack.c.b16 %v426, %v425
    %v462 = vpack.c.b16 %v428, %v427
    %v463 = vpack.c.b16 %v430, %v429
    %v464 = vpack.c.b16 %v432, %v431
    %497 = vmatprep.subr.bf16.mxu0 0
    %498 = vmatpush1.bf16.msra.mxu0 %v433
    %499 = vmatprep.subr.bf16.mxu0 0
    %500 = vmatpush1.bf16.msra.mxu0 %v434
    %501 = vmatprep.subr.bf16.mxu0 0
    %502 = vmatpush1.bf16.msra.mxu0 %v435
    %503 = vmatprep.subr.bf16.mxu0 0
    %504 = vmatpush1.bf16.msra.mxu0 %v436
    %505 = vmatprep.subr.bf16.mxu0 0
    %506 = vmatpush1.bf16.msra.mxu0 %v437
    %507 = vmatprep.subr.bf16.mxu0 0
    %508 = vmatpush1.bf16.msra.mxu0 %v438
    %509 = vmatprep.subr.bf16.mxu0 0
    %510 = vmatpush1.bf16.msra.mxu0 %v439
    %511 = vmatprep.subr.bf16.mxu0 0
    %512 = vmatpush1.bf16.msra.mxu0 %v440
    %513 = vmatprep.subr.bf16.mxu0 0
    %514 = vmatpush1.bf16.msra.mxu0 %v441
    %515 = vmatprep.subr.bf16.mxu0 0
    %516 = vmatpush1.bf16.msra.mxu0 %v442
    %517 = vmatprep.subr.bf16.mxu0 0
    %518 = vmatpush1.bf16.msra.mxu0 %v443
    %519 = vmatprep.subr.bf16.mxu0 0
    %520 = vmatpush1.bf16.msra.mxu0 %v444
    %521 = vmatprep.subr.bf16.mxu0 0
    %522 = vmatpush1.bf16.msra.mxu0 %v445
    %523 = vmatprep.subr.bf16.mxu0 0
    %524 = vmatpush1.bf16.msra.mxu0 %v446
    %525 = vmatprep.subr.bf16.mxu0 0
    %526 = vmatpush1.bf16.msra.mxu0 %v447
    %527 = vmatprep.subr.bf16.mxu0 0
    %528 = vmatpush1.bf16.msra.mxu0 %v448
    %529 = vmatprep.mubr.bf16.mxu0 %v231
    %530 = vmatmul.mubr.bf16.gmra.mrb[0].mxu0 %v230
    %v531 = vpop.f32.mrb[0].mxu0
    %v532 = vadd.f32 %v303, %v531
    %v533 = vpop.f32.mrb[0].mxu0
    %v534 = vpop.f32.mrb[0].mxu0
    %v535 = vadd.f32 %v303, %v534
    %v536 = vpop.f32.mrb[0].mxu0
    %537 = vdwg.mxu0
    %538 = vmatprep.subr.bf16.mxu0 0
    %539 = vmatpush1.bf16.msra.mxu0 %v449
    %540 = vmatprep.subr.bf16.mxu0 0
    %541 = vmatpush1.bf16.msra.mxu0 %v450
    %542 = vmatprep.subr.bf16.mxu0 0
    %543 = vmatpush1.bf16.msra.mxu0 %v451
    %544 = vmatprep.subr.bf16.mxu0 0
    %545 = vmatpush1.bf16.msra.mxu0 %v452
    %546 = vmatprep.subr.bf16.mxu0 0
    %547 = vmatpush1.bf16.msra.mxu0 %v453
    %548 = vmatprep.subr.bf16.mxu0 0
    %549 = vmatpush1.bf16.msra.mxu0 %v454
    %550 = vmatprep.subr.bf16.mxu0 0
    %551 = vmatpush1.bf16.msra.mxu0 %v455
    %552 = vmatprep.subr.bf16.mxu0 0
    %553 = vmatpush1.bf16.msra.mxu0 %v456
    %554 = vmatprep.subr.bf16.mxu0 0
    %555 = vmatpush1.bf16.msra.mxu0 %v457
    %556 = vmatprep.subr.bf16.mxu0 0
    %557 = vmatpush1.bf16.msra.mxu0 %v458
    %558 = vmatprep.subr.bf16.mxu0 0
    %559 = vmatpush1.bf16.msra.mxu0 %v459
    %560 = vmatprep.subr.bf16.mxu0 0
    %561 = vmatpush1.bf16.msra.mxu0 %v460
    %562 = vmatprep.subr.bf16.mxu0 0
    %563 = vmatpush1.bf16.msra.mxu0 %v461
    %564 = vmatprep.subr.bf16.mxu0 0
    %565 = vmatpush1.bf16.msra.mxu0 %v462
    %566 = vmatprep.subr.bf16.mxu0 0
    %567 = vmatpush1.bf16.msra.mxu0 %v463
    %568 = vmatprep.subr.bf16.mxu0 0
    %569 = vmatpush1.bf16.msra.mxu0 %v464
    %570 = vmatprep.mubr.bf16.mxu0 %v233
    %571 = vmatmul.mubr.bf16.gmra.mrb[0].mxu0 %v232
    %v572 = vpop.f32.mrb[0].mxu0
    %v573 = vadd.f32 %v532, %v572
    %v574 = vpop.f32.mrb[0].mxu0
    %v575 = vpop.f32.mrb[0].mxu0
    %v576 = vadd.f32 %v535, %v575
    %v577 = vpop.f32.mrb[0].mxu0
    %578 = vdwg.mxu0
    %v579 = vmax.f32 %v573, 0.0
    %v580 = vmax.f32 %v576, 0.0
    %v581 = vld [vmem:[%s5] sm:$0x1]
    %v583 = vlaneseq
    %v584 = vshrl.u32 %v583, 7
    %v585 = vsub.s32 0, %v584
    %v586 = vrot.slane %v581, %v585
    %v588 = vmul.f32 %v579, %v586
    %v589 = vmul.f32 %v580, %v586
    %590 = vadd.xlane.f32.xlu0 %v588
    %v591 = vpop.xlane.xlu0 %590
    %592 = vadd.xlane.f32.xlu0 %v589
    %v593 = vpop.xlane.xlu0 %592
    %v594 = vld [vmem:[#allocation2] sm:$0x1]
    %v596 = vlaneseq
    %v597 = vshrl.u32 %v596, 7
    %v598 = vsub.s32 0, %v597
    %v599 = vrot.slane %v594, %v598
    %v601 = vadd.f32 %v591, %v599
    %v602 = vadd.f32 %v593, %v599
    %vm603 = vcmask 7168
    %604 = vst.msk [vmem:[%s7] sm:$0xff] %vm603, %v601
    %605 = vst.msk [vmem:[%s7 + $0x8] sm:$0xff] %vm603, %v602
    // Predicated region
    $region42: #{tpu_custom_call.1} parent=1 // pred_check
      _
    $region43: #{tpu_custom_call.1} parent=1 // pred_check_branch
      %607 = sbr.rel (0) target = $region45
    $region44: #{tpu_custom_call.1} parent=1 // pred_region
      _
    $region45: #{tpu_custom_call.1} parent=1 // pred_fallthru
      _
    // Predicated region
    $region46: #{tpu_custom_call.1} parent=1 // pred_check
      _
    $region47: #{tpu_custom_call.1} parent=1 // pred_check_branch
      %609 = sbr.rel (0) target = $region49
    $region48: #{tpu_custom_call.1} parent=1 // pred_region
      _
    $region49: #{tpu_custom_call.1} parent=1 // pred_fallthru
      _
    %610 = vsyncpa [#allocation4], 1
    %611 = vsyncpa [#allocation6], 1

</llo_original>
